<compile_context>
chip_gen: v7x
topology: tpu7x:2x2x1
jax: 0.10.0
libtpu: 0.0.40
codegen_flags: <defaults>
</compile_context>

<pallas_src>
import functools
import numpy as np

import jax
import jax.numpy as jnp
from jax.experimental import pallas as pl
from jax.experimental.pallas import tpu as pltpu


def _round_up(x, m):
    return ((x + m - 1) // m) * m


def _vmem_capacity_bytes():
    try:
        info = pltpu.get_tpu_info()
        cap = getattr(info, "vmem_capacity_bytes", None)
        if cap:
            return int(cap)
    except Exception:
        pass
    # Generation-aware fallback (do NOT default a 128 MiB chip to 64 MiB).
    try:
        kind = jax.devices()[0].device_kind.lower()
        if "v7" in kind or "7x" in kind:
            return 64 * 1024 * 1024
    except Exception:
        pass
    return 128 * 1024 * 1024  # v5e / v6e


def _pick_tiles(Po, tile_cap, min_tiles):
    """Pick (num_tiles, tile_po) minimizing padding; tile is a 128-multiple."""
    nt0 = max(int(min_tiles), pl.cdiv(Po, tile_cap), 1)
    best_nt, best_tile, best_pad = None, None, None
    for nt in range(nt0, nt0 + 8):
        tile = _round_up(pl.cdiv(Po, nt), 128)
        if tile > tile_cap:
            continue
        pad = nt * tile - Po
        if best_pad is None or pad < best_pad:
            best_nt, best_tile, best_pad = nt, tile, pad
        if pad == 0:
            break
    if best_nt is None:   # defensive; tile_cap is already a 128-multiple
        best_nt, best_tile = pl.cdiv(Po, tile_cap), tile_cap
    return best_nt, best_tile


# ----------------------------------------------------------------------------
# Pallas kernel: chained bilinear sampling of one (C*Hi, Wi) image slab onto
# one TILE_PO-wide slab of output pixels.
#   MXU:  (C*Hi, Wi) @ (Wi, T)  -> (C*Hi, T)
#   VPU:  (C, Hi, T) * wy       -> sublane (XLU) reduce over Hi -> (C, T)
# ----------------------------------------------------------------------------
def _affine_sample_kernel(theta_ref, grid_ref, src_ref, out_ref, *, Hi, Wi):
    n = pl.program_id(0)

    # theta rows pre-folded with grid_sample's unnormalization on the host:
    # they map normalized output coords (xs, ys) straight to INPUT PIXEL
    # coordinates (ix, iy) in PyTorch (x=width, y=height) order.
    tx0 = theta_ref[n, 0]
    tx1 = theta_ref[n, 1]
    tx2 = theta_ref[n, 2]
    ty0 = theta_ref[n, 3]
    ty1 = theta_ref[n, 4]
    ty2 = theta_ref[n, 5]

    xs = grid_ref[0:1, :]                     # (1, T) normalized output x
    ys = grid_ref[1:2, :]                     # (1, T) normalized output y

    ix = tx0 * xs + tx1 * ys + tx2            # (1, T) input pixel x
    iy = ty0 * xs + ty1 * ys + ty2            # (1, T) input pixel y

    ix0f = jnp.floor(ix)
    iy0f = jnp.floor(iy)
    fx = ix - ix0f                            # (1, T) in [0, 1)
    fy = iy - iy0f
    # NaN -> out-of-range corner (zero weight); clip BEFORE the int cast so
    # extreme thetas cannot overflow the f32->int32 conversion.  Zeros
    # padding falls out of the equality masks below.
    ix0f = jnp.where(jnp.isnan(ix0f), jnp.float32(Wi + 2), ix0f)
    iy0f = jnp.where(jnp.isnan(iy0f), jnp.float32(Hi + 2), iy0f)
    ix0 = jnp.clip(ix0f, -2.0, float(Wi)).astype(jnp.int32)   # (1, T)
    iy0 = jnp.clip(iy0f, -2.0, float(Hi)).astype(jnp.int32)

    # Separable bilinear weights -- only (Wi, T) and (Hi, T) ever built,
    # never the dense (Hi*Wi, T) slab.  Iotas are thin columns; the compare
    # broadcasts them across lanes.
    qx = jax.lax.broadcasted_iota(jnp.int32, (Wi, 1), 0)          # (Wi, 1)
    wx = (jnp.where(qx == ix0, 1.0 - fx, 0.0) +
          jnp.where(qx == ix0 + 1, fx, 0.0)).astype(src_ref.dtype)  # (Wi, T)
    qy = jax.lax.broadcasted_iota(jnp.int32, (Hi, 1), 0)          # (Hi, 1)
    wy = (jnp.where(qy == iy0, 1.0 - fy, 0.0) +
          jnp.where(qy == iy0 + 1, fy, 0.0))                       # (Hi, T) f32

    # MXU contraction over the width axis (src already in compute dtype).
    src2d = src_ref[0]                                             # (C*Hi, Wi)
    tmp = jnp.dot(src2d, wx, preferred_element_type=jnp.float32)   # (C*Hi, T)

    c = out_ref.shape[1]
    tmp = tmp.reshape(c, Hi, tmp.shape[-1])                        # (C, Hi, T)

    # VPU multiply by the row weights + sublane (XLU) reduce over Hi.
    dst = jnp.sum(tmp * wy[None, :, :], axis=1)                    # (C, T)
    out_ref[0] = dst.astype(out_ref.dtype)


# ----------------------------------------------------------------------------
# Host-side glue: MONAI theta preprocessing (pad to homogeneous,
# to_norm_affine, reverse_indexing) and folding grid_sample's
# unnormalization into theta.
# ----------------------------------------------------------------------------
def _normalize_transform(shape, align_corners):
    shape = np.asarray(shape, dtype=np.float64)
    d = shape.shape[0]
    mat = np.eye(d + 1, dtype=np.float64)
    if align_corners:
        s = np.where(shape <= 1.0, 2.0, shape)
        mat[np.arange(d), np.arange(d)] = 2.0 / (s - 1.0)
        mat[:d, -1] = -1.0
    else:
        s = np.where(shape <= 0.0, 2.0, shape)
        mat[np.arange(d), np.arange(d)] = 2.0 / s
        mat[:d, -1] = 1.0 / shape - 1.0
    return mat


def _prepare_theta(theta, src_shape, dst_spatial, *, normalized, align_corners,
                   reverse_indexing):
    """Returns (Nt, 6): top 2 rows of the normalized-coordinate affine."""
    theta = jnp.asarray(theta, jnp.float32)
    if theta.ndim not in (2, 3):
        raise ValueError("affine must be Nxdxd or dxd.")
    if theta.ndim == 2:
        theta = theta[None]
    if tuple(theta.shape[1:]) == (2, 3):
        pad = jnp.tile(jnp.asarray([[[0.0, 0.0, 1.0]]], jnp.float32),
                       (theta.shape[0], 1, 1))
        theta = jnp.concatenate([theta, pad], axis=1)
    if tuple(theta.shape[1:]) != (3, 3):
        raise ValueError(f"affine must be Nx3x3, got: {theta.shape}.")

    N = src_shape[0]
    Hi, Wi = src_shape[2], src_shape[3]
    Ho, Wo = dst_spatial

    if not normalized:
        src_x = jnp.asarray(_normalize_transform((Hi, Wi), align_corners),
                            jnp.float32)
        dst_x_inv = jnp.asarray(
            np.linalg.inv(_normalize_transform((Ho, Wo), align_corners)),
            jnp.float32)
        theta = src_x @ theta @ dst_x_inv

    if reverse_indexing:
        theta = theta.at[:, :2].set(theta[:, jnp.asarray([1, 0])])
        theta = theta.at[:, :, :2].set(theta[:, :, jnp.asarray([1, 0])])

    if theta.shape[0] not in (1, N):
        raise ValueError("batch dimension of affine and image does not match.")
    return theta[:, :2].reshape(theta.shape[0], 6)


def _fold_unnormalize(theta_flat, Hi, Wi, align_corners):
    """Fold grid_sample's normalized->pixel mapping into the theta rows."""
    t = theta_flat.reshape(-1, 2, 3)
    if align_corners:
        ax, bx = 0.5 * (Wi - 1), 0.5 * (Wi - 1)
        ay, by = 0.5 * (Hi - 1), 0.5 * (Hi - 1)
    else:
        ax, bx = 0.5 * Wi, 0.5 * (Wi - 1)
        ay, by = 0.5 * Hi, 0.5 * (Hi - 1)
    scale = jnp.asarray([[ax], [ay]], jnp.float32)              # (2, 1)
    shift = jnp.asarray([[0.0, 0.0, bx], [0.0, 0.0, by]], jnp.float32)
    return (t * scale + shift).reshape(-1, 6)


def _make_grid_planes(Ho, Wo, po_pad, align_corners):
    """(2, po_pad) f32: row 0 = normalized x, row 1 = normalized y."""
    p = np.arange(po_pad, dtype=np.int64)
    ho = (p // Wo).astype(np.float64)
    wo = (p % Wo).astype(np.float64)
    if align_corners:
        xs = 2.0 * wo / max(Wo - 1, 1) - 1.0
        ys = 2.0 * ho / max(Ho - 1, 1) - 1.0
    else:
        xs = (2.0 * wo + 1.0) / Wo - 1.0
        ys = (2.0 * ho + 1.0) / Ho - 1.0
    return jnp.asarray(np.stack([xs, ys]).astype(np.float32))


class AffineTransformPallas:
    def __init__(self, spatial_size=None, normalized=False, mode="bilinear",
                 padding_mode="zeros", align_corners=False,
                 reverse_indexing=True, compute_dtype=None):
        if mode != "bilinear":
            raise NotImplementedError("only bilinear mode")  # TODO(synk): nearest mode
        if padding_mode != "zeros":
            raise NotImplementedError("only zeros padding")  # TODO(synk): border/reflection padding
        self.spatial_size = tuple(spatial_size) if spatial_size is not None else None
        self.normalized = normalized
        self.align_corners = align_corners
        self.reverse_indexing = reverse_indexing
        # None -> follow the src dtype (exact f32 path for f32 inputs; the
        # MXU is not the bottleneck for this kernel).
        self.compute_dtype = compute_dtype

    def __call__(self, src, theta, spatial_size=None):
        src = jnp.asarray(src)
        # TODO(synk): spatial 3D (trilinear grid_sample) not implemented.
        if src.ndim - 2 != 2:
            raise NotImplementedError("only spatial 2D supported")
        N, C, Hi, Wi = src.shape
        dst_spatial = (Hi, Wi)
        if self.spatial_size is not None:
            dst_spatial = self.spatial_size
        if spatial_size is not None:
            dst_spatial = tuple(spatial_size)
        Ho, Wo = dst_spatial

        theta_norm = _prepare_theta(
            theta, src.shape, dst_spatial, normalized=self.normalized,
            align_corners=self.align_corners,
            reverse_indexing=self.reverse_indexing)
        Nt = theta_norm.shape[0]

        if self.compute_dtype is not None:
            compute_dtype = jnp.dtype(self.compute_dtype)
        elif jnp.issubdtype(src.dtype, jnp.floating):
            compute_dtype = jnp.dtype(src.dtype)
        else:
            compute_dtype = jnp.dtype(jnp.float32)
        out_dtype = (src.dtype if jnp.issubdtype(src.dtype, jnp.floating)
                     else jnp.dtype(jnp.float32))
        c_itemsize = compute_dtype.itemsize
        out_itemsize = jnp.dtype(out_dtype).itemsize

        Po = Ho * Wo
        Wi_lanes = _round_up(Wi, 128)   # VMEM lane padding of the narrow src block

        # Generation-aware VMEM budget (v7x: 64 MiB physical -> ~48 MiB scoped).
        vmem_cap = _vmem_capacity_bytes()
        vmem_limit = min(vmem_cap * 3 // 4, 96 * 1024 * 1024)

        def src_block_bytes(ck):        # double-buffered resident src block
            return 2 * ck * Hi * Wi_lanes * c_itemsize

        # TODO(synk): tile the input-row (Hi) axis for images too large to
        # keep resident in VMEM (not needed for typical 2D medical images).
        if src_block_bytes(C) > vmem_limit - (8 << 20):
            raise NotImplementedError("input image too large for resident-src kernel")

        # Shared theta: fold the batch into the matmul M dimension so the
        # sampling weights are built once per output tile for the whole batch.
        collapse = (Nt == 1 and N > 1
                    and src_block_bytes(N * C) <= vmem_limit // 2)
        if collapse:
            n_k, c_k = 1, N * C
            theta_k = theta_norm
        else:
            n_k, c_k = N, C
            theta_k = theta_norm if Nt == N else jnp.tile(theta_norm, (N, 1))

        theta_pix = _fold_unnormalize(theta_k, Hi, Wi, self.align_corners)
        # Host-side reshape + compute-dtype cast: the kernel sees a matmul-ready
        # (c_k*Hi, Wi) slab with no per-step relayout or cast.
        src_rows = src.reshape(n_k, c_k * Hi, Wi).astype(compute_dtype)

        # Per-output-column VMEM bytes: f32 matmul result + wy product
        # intermediate, double-buffered out block, wx/wy weights, grid planes.
        per_col = (8 * c_k * Hi
                   + (2 * out_itemsize + 8) * _round_up(c_k, 8)
                   + (4 + c_itemsize) * Wi
                   + 8 * Hi
                   + 96)
        tile_cap = (vmem_limit - src_block_bytes(c_k) - (2 << 20)) // per_col
        tile_cap = max(128, (min(int(tile_cap), 2048) // 128) * 128)

        # Guarantee >= 2 parallel grid steps (both v7x TensorCores) whenever
        # the output is big enough to split without padding a 1-tile problem.
        min_tiles = 1 if (n_k >= 2 or Po <= 128) else 2
        num_tiles, tile_po = _pick_tiles(Po, tile_cap, min_tiles)
        po_pad = num_tiles * tile_po

        grid_planes = _make_grid_planes(Ho, Wo, po_pad, self.align_corners)

        kernel = functools.partial(_affine_sample_kernel, Hi=Hi, Wi=Wi)

        out_flat = pl.pallas_call(
            kernel,
            out_shape=jax.ShapeDtypeStruct((n_k, c_k, po_pad), out_dtype),
            grid_spec=pltpu.PrefetchScalarGridSpec(
                num_scalar_prefetch=0,
                grid=(n_k, num_tiles),
                in_specs=[
                    # theta: whole array resident in SMEM (constant block).
                    pl.BlockSpec((n_k, 6), lambda n, t: (0, 0),
                                 memory_space=pltpu.MemorySpace.SMEM),
                    # normalized output-grid planes for this Po tile.
                    pl.BlockSpec((2, tile_po), lambda n, t: (0, t)),
                    # matmul-ready image slab for batch n (resident across t).
                    # TODO(synk): single-buffer via pipeline_mode=pl.Buffered(1)
                    # once buffer_count=1 is universally supported.
                    pl.BlockSpec((1, c_k * Hi, Wi), lambda n, t: (n, 0, 0)),
                ],
                out_specs=pl.BlockSpec((1, c_k, tile_po),
                                       lambda n, t: (n, 0, t)),
            ),
            compiler_params=pltpu.CompilerParams(
                dimension_semantics=("parallel", "parallel"),
                vmem_limit_bytes=int(vmem_limit)),
        )(theta_pix, grid_planes, src_rows)

        return out_flat[:, :, :Po].reshape(N, C, Ho, Wo)


# ----------------------------------------------------------------------------
# Pure-JAX reference (gather-based grid_sample) for the self-check.
# ----------------------------------------------------------------------------
def _reference_grid_sample(src, theta_flat, Ho, Wo, align_corners=False):
    N, C, Hi, Wi = src.shape
    theta = theta_flat.reshape(N, 2, 3)
    ho, wo = jnp.meshgrid(jnp.arange(Ho, dtype=jnp.float32),
                          jnp.arange(Wo, dtype=jnp.float32), indexing="ij")
    if align_corners:
        xs = 2.0 * wo / max(Wo - 1, 1) - 1.0
        ys = 2.0 * ho / max(Ho - 1, 1) - 1.0
    else:
        xs = (2.0 * wo + 1.0) / Wo - 1.0
        ys = (2.0 * ho + 1.0) / Ho - 1.0
    gx = (theta[:, 0, 0, None, None] * xs + theta[:, 0, 1, None, None] * ys
          + theta[:, 0, 2, None, None])
    gy = (theta[:, 1, 0, None, None] * xs + theta[:, 1, 1, None, None] * ys
          + theta[:, 1, 2, None, None])
    if align_corners:
        ix = (gx + 1.0) * 0.5 * (Wi - 1)
        iy = (gy + 1.0) * 0.5 * (Hi - 1)
    else:
        ix = ((gx + 1.0) * Wi - 1.0) * 0.5
        iy = ((gy + 1.0) * Hi - 1.0) * 0.5
    x0 = jnp.floor(ix)
    y0 = jnp.floor(iy)
    fx = ix - x0
    fy = iy - y0
    x0i = x0.astype(jnp.int32)
    y0i = y0.astype(jnp.int32)

    def gather(img, yy, xx):
        valid = (yy >= 0) & (yy < Hi) & (xx >= 0) & (xx < Wi)
        yyc = jnp.clip(yy, 0, Hi - 1)
        xxc = jnp.clip(xx, 0, Wi - 1)
        return img[:, yyc, xxc] * valid[None].astype(img.dtype)

    def per_batch(img, x0b, y0b, fxb, fyb):
        v00 = gather(img, y0b, x0b)
        v01 = gather(img, y0b, x0b + 1)
        v10 = gather(img, y0b + 1, x0b)
        v11 = gather(img, y0b + 1, x0b + 1)
        return (v00 * (1 - fxb) * (1 - fyb) + v01 * fxb * (1 - fyb)
                + v10 * (1 - fxb) * fyb + v11 * fxb * fyb)

    return jax.vmap(per_batch)(src, x0i, y0i, fx, fy)


if __name__ == "__main__":
    key = jax.random.PRNGKey(0)
    k1, k2 = jax.random.split(key)

    N, C, H, W = 2, 4, 16, 16
    src = jax.random.normal(k1, (N, C, H, W), dtype=jnp.float32)
    # theta in scipy "i,j" pixel-coordinate convention
    # (defaults: normalized=False, reverse_indexing=True)
    eye = jnp.broadcast_to(jnp.eye(2, 3, dtype=jnp.float32), (N, 2, 3))
    theta = eye + 0.1 * jax.random.normal(k2, (N, 2, 3), dtype=jnp.float32)

    theta_norm = _prepare_theta(theta, src.shape, (H, W), normalized=False,
                                align_corners=False, reverse_indexing=True)
    ref = _reference_grid_sample(src, theta_norm, H, W, align_corners=False)

    # 1) default path: compute dtype follows src (f32) -> tight check.
    xform = AffineTransformPallas()
    out = jax.block_until_ready(xform(src, theta))
    assert out.shape == (N, C, H, W), out.shape
    np.testing.assert_allclose(np.asarray(out), np.asarray(ref),
                               atol=1e-4, rtol=1e-4)

    # 2) explicit bf16 MXU path: looser tolerance for bf16 src/weights.
    xform_bf16 = AffineTransformPallas(compute_dtype=jnp.bfloat16)
    out_bf16 = jax.block_until_ready(xform_bf16(src, theta))
    np.testing.assert_allclose(np.asarray(out_bf16), np.asarray(ref),
                               atol=5e-2, rtol=5e-2)

    # 3) shared theta (batch-collapse path) with a non-square output size
    #    (also exercises the multi-tile, zero-padding tile selection).
    Ho, Wo = 24, 16
    theta1 = theta[0]                                   # (2, 3), no batch dim
    xform_sz = AffineTransformPallas(spatial_size=(Ho, Wo))
    out_sz = jax.block_until_ready(xform_sz(src, theta1))
    assert out_sz.shape == (N, C, Ho, Wo), out_sz.shape
    theta1_norm = _prepare_theta(theta1, src.shape, (Ho, Wo), normalized=False,
                                 align_corners=False, reverse_indexing=True)
    ref_sz = _reference_grid_sample(src, jnp.tile(theta1_norm, (N, 1)),
                                    Ho, Wo, align_corners=False)
    np.testing.assert_allclose(np.asarray(out_sz), np.asarray(ref_sz),
                               atol=1e-4, rtol=1e-4)

    print("KERNEL_OK")
</pallas_src>

<mosaic_0001>
module attributes {stable_mosaic.version = 11 : i64} {
  func.func @_affine_sample_kernel(%arg0: i32, %arg1: i32, %arg2: memref<2x6xf32, #tpu.memory_space<smem>>, %arg3: memref<2x256xf32, #tpu.memory_space<vmem>>, %arg4: memref<1x64x16xf32, #tpu.memory_space<vmem>>, %arg5: memref<1x4x256xf32, #tpu.memory_space<vmem>>) attributes {dimension_semantics = [#tpu.dimension_semantics<parallel>, #tpu.dimension_semantics<parallel>], iteration_bounds = array<i64: 2, 1>, scalar_prefetch = 0 : i64, scratch_operands = 0 : i64, tpu.core_type = #tpu.core_type<tc>, window_params = [{transform_indices = @transform_0, window_bounds = array<i64: 2, 6>}, {transform_indices = @transform_1, window_bounds = array<i64: 2, 256>}, {transform_indices = @transform_2, window_bounds = array<i64: 1, 64, 16>}, {transform_indices = @transform_3, window_bounds = array<i64: 1, 4, 256>}]} {
    %0 = arith.index_cast %arg0 : i32 to index
    %c0 = arith.constant 0 : index
    %1 = memref.load %arg2[%0, %c0] : memref<2x6xf32, #tpu.memory_space<smem>>
    %2 = arith.index_cast %arg0 : i32 to index
    %c1 = arith.constant 1 : index
    %3 = memref.load %arg2[%2, %c1] : memref<2x6xf32, #tpu.memory_space<smem>>
    %4 = arith.index_cast %arg0 : i32 to index
    %c2 = arith.constant 2 : index
    %5 = memref.load %arg2[%4, %c2] : memref<2x6xf32, #tpu.memory_space<smem>>
    %6 = arith.index_cast %arg0 : i32 to index
    %c3 = arith.constant 3 : index
    %7 = memref.load %arg2[%6, %c3] : memref<2x6xf32, #tpu.memory_space<smem>>
    %8 = arith.index_cast %arg0 : i32 to index
    %c4 = arith.constant 4 : index
    %9 = memref.load %arg2[%8, %c4] : memref<2x6xf32, #tpu.memory_space<smem>>
    %10 = arith.index_cast %arg0 : i32 to index
    %c5 = arith.constant 5 : index
    %11 = memref.load %arg2[%10, %c5] : memref<2x6xf32, #tpu.memory_space<smem>>
    %c0_0 = arith.constant 0 : index
    %c0_1 = arith.constant 0 : index
    %12 = vector.load %arg3[%c0_0, %c0_1] : memref<2x256xf32, #tpu.memory_space<vmem>>, vector<1x256xf32>
    %c1_2 = arith.constant 1 : index
    %c0_3 = arith.constant 0 : index
    %13 = vector.load %arg3[%c1_2, %c0_3] : memref<2x256xf32, #tpu.memory_space<vmem>>, vector<1x256xf32>
    %14 = vector.broadcast %1 : f32 to vector<1x256xf32>
    %15 = arith.mulf %14, %12 : vector<1x256xf32>
    %16 = vector.broadcast %3 : f32 to vector<1x256xf32>
    %17 = arith.mulf %16, %13 : vector<1x256xf32>
    %18 = arith.addf %15, %17 : vector<1x256xf32>
    %19 = vector.broadcast %5 : f32 to vector<1x256xf32>
    %20 = arith.addf %18, %19 : vector<1x256xf32>
    %21 = vector.broadcast %7 : f32 to vector<1x256xf32>
    %22 = arith.mulf %21, %12 : vector<1x256xf32>
    %23 = vector.broadcast %9 : f32 to vector<1x256xf32>
    %24 = arith.mulf %23, %13 : vector<1x256xf32>
    %25 = arith.addf %22, %24 : vector<1x256xf32>
    %26 = vector.broadcast %11 : f32 to vector<1x256xf32>
    %27 = arith.addf %25, %26 : vector<1x256xf32>
    %28 = math.floor %20 : vector<1x256xf32>
    %29 = math.floor %27 : vector<1x256xf32>
    %30 = arith.subf %20, %28 : vector<1x256xf32>
    %31 = arith.subf %27, %29 : vector<1x256xf32>
    %32 = arith.cmpf one, %28, %28 : vector<1x256xf32>
    %cst = arith.constant 1.800000e+01 : f32
    %33 = vector.broadcast %cst : f32 to vector<1x256xf32>
    %34 = arith.select %32, %33, %28 : vector<1x256xi1>, vector<1x256xf32>
    %35 = arith.cmpf one, %29, %29 : vector<1x256xf32>
    %cst_4 = arith.constant 1.800000e+01 : f32
    %36 = vector.broadcast %cst_4 : f32 to vector<1x256xf32>
    %37 = arith.select %35, %36, %29 : vector<1x256xi1>, vector<1x256xf32>
    %cst_5 = arith.constant -2.000000e+00 : f32
    %cst_6 = arith.constant 1.600000e+01 : f32
    %38 = vector.broadcast %cst_5 : f32 to vector<1x256xf32>
    %39 = arith.maximumf %38, %34 : vector<1x256xf32>
    %40 = vector.broadcast %cst_6 : f32 to vector<1x256xf32>
    %41 = arith.minimumf %40, %39 : vector<1x256xf32>
    %42 = arith.fptosi %41 : vector<1x256xf32> to vector<1x256xi32>
    %cst_7 = arith.constant -2.000000e+00 : f32
    %cst_8 = arith.constant 1.600000e+01 : f32
    %43 = vector.broadcast %cst_7 : f32 to vector<1x256xf32>
    %44 = arith.maximumf %43, %37 : vector<1x256xf32>
    %45 = vector.broadcast %cst_8 : f32 to vector<1x256xf32>
    %46 = arith.minimumf %45, %44 : vector<1x256xf32>
    %47 = arith.fptosi %46 : vector<1x256xf32> to vector<1x256xi32>
    %48 = tpu.iota {dimensions = array<i32: 0>} : vector<16x1xi32>
    %49 = vector.broadcast %48 : vector<16x1xi32> to vector<16x256xi32>
    %50 = vector.broadcast %42 : vector<1x256xi32> to vector<16x256xi32>
    %51 = arith.cmpi eq, %49, %50 : vector<16x256xi32>
    %cst_9 = arith.constant 1.000000e+00 : f32
    %52 = vector.broadcast %cst_9 : f32 to vector<1x256xf32>
    %53 = arith.subf %52, %30 : vector<1x256xf32>
    %cst_10 = arith.constant 0.000000e+00 : f32
    %54 = vector.shape_cast %53 : vector<1x256xf32> to vector<1x256xf32>
    %55 = vector.broadcast %54 : vector<1x256xf32> to vector<16x256xf32>
    %56 = vector.broadcast %cst_10 : f32 to vector<16x256xf32>
    %57 = arith.select %51, %55, %56 : vector<16x256xi1>, vector<16x256xf32>
    %c1_i32 = arith.constant 1 : i32
    %58 = vector.broadcast %c1_i32 : i32 to vector<1x256xi32>
    %59 = arith.addi %42, %58 : vector<1x256xi32>
    %60 = vector.broadcast %48 : vector<16x1xi32> to vector<16x256xi32>
    %61 = vector.broadcast %59 : vector<1x256xi32> to vector<16x256xi32>
    %62 = arith.cmpi eq, %60, %61 : vector<16x256xi32>
    %cst_11 = arith.constant 0.000000e+00 : f32
    %63 = vector.shape_cast %30 : vector<1x256xf32> to vector<1x256xf32>
    %64 = vector.broadcast %63 : vector<1x256xf32> to vector<16x256xf32>
    %65 = vector.broadcast %cst_11 : f32 to vector<16x256xf32>
    %66 = arith.select %62, %64, %65 : vector<16x256xi1>, vector<16x256xf32>
    %67 = arith.addf %57, %66 : vector<16x256xf32>
    %68 = tpu.iota {dimensions = array<i32: 0>} : vector<16x1xi32>
    %69 = vector.broadcast %68 : vector<16x1xi32> to vector<16x256xi32>
    %70 = vector.broadcast %47 : vector<1x256xi32> to vector<16x256xi32>
    %71 = arith.cmpi eq, %69, %70 : vector<16x256xi32>
    %cst_12 = arith.constant 1.000000e+00 : f32
    %72 = vector.broadcast %cst_12 : f32 to vector<1x256xf32>
    %73 = arith.subf %72, %31 : vector<1x256xf32>
    %cst_13 = arith.constant 0.000000e+00 : f32
    %74 = vector.shape_cast %73 : vector<1x256xf32> to vector<1x256xf32>
    %75 = vector.broadcast %74 : vector<1x256xf32> to vector<16x256xf32>
    %76 = vector.broadcast %cst_13 : f32 to vector<16x256xf32>
    %77 = arith.select %71, %75, %76 : vector<16x256xi1>, vector<16x256xf32>
    %c1_i32_14 = arith.constant 1 : i32
    %78 = vector.broadcast %c1_i32_14 : i32 to vector<1x256xi32>
    %79 = arith.addi %47, %78 : vector<1x256xi32>
    %80 = vector.broadcast %68 : vector<16x1xi32> to vector<16x256xi32>
    %81 = vector.broadcast %79 : vector<1x256xi32> to vector<16x256xi32>
    %82 = arith.cmpi eq, %80, %81 : vector<16x256xi32>
    %cst_15 = arith.constant 0.000000e+00 : f32
    %83 = vector.shape_cast %31 : vector<1x256xf32> to vector<1x256xf32>
    %84 = vector.broadcast %83 : vector<1x256xf32> to vector<16x256xf32>
    %85 = vector.broadcast %cst_15 : f32 to vector<16x256xf32>
    %86 = arith.select %82, %84, %85 : vector<16x256xi1>, vector<16x256xf32>
    %87 = arith.addf %77, %86 : vector<16x256xf32>
    %c0_16 = arith.constant 0 : index
    %c0_17 = arith.constant 0 : index
    %c0_18 = arith.constant 0 : index
    %88 = vector.load %arg4[%c0_16, %c0_17, %c0_18] : memref<1x64x16xf32, #tpu.memory_space<vmem>>, vector<1x64x16xf32>
    %89 = vector.shape_cast %88 : vector<1x64x16xf32> to vector<64x16xf32>
    %cst_19 = arith.constant dense<0.000000e+00> : vector<64x256xf32>
    %90 = tpu.matmul %89, %67, %cst_19 {dimension_numbers = #tpu.dot_dimension_numbers<[1], [0], [0], [1], [0, 0, 1, 1], [], []>} : vector<64x16xf32>, vector<16x256xf32>, vector<64x256xf32> -> vector<64x256xf32>
    %91 = vector.shape_cast %90 : vector<64x256xf32> to vector<4x16x256xf32>
    %92 = vector.shape_cast %87 : vector<16x256xf32> to vector<1x16x256xf32>
    %93 = vector.broadcast %92 : vector<1x16x256xf32> to vector<4x16x256xf32>
    %94 = arith.mulf %91, %93 : vector<4x16x256xf32>
    %cst_20 = arith.constant dense<0.000000e+00> : vector<4x256xf32>
    %95 = vector.multi_reduction <add>, %94, %cst_20 [1] : vector<4x16x256xf32> to vector<4x256xf32>
    %c0_21 = arith.constant 0 : index
    %c0_22 = arith.constant 0 : index
    %c0_23 = arith.constant 0 : index
    %96 = vector.load %arg5[%c0_21, %c0_22, %c0_23] : memref<1x4x256xf32, #tpu.memory_space<vmem>>, vector<1x4x256xf32>
    %97 = vector.shape_cast %96 : vector<1x4x256xf32> to vector<4x256xf32>
    %98 = vector.shape_cast %95 : vector<4x256xf32> to vector<1x4x256xf32>
    tpu.vector_store %arg5[%c0_21, %c0_22, %c0_23], %98 {strides = array<i32>} : memref<1x4x256xf32, #tpu.memory_space<vmem>>, vector<1x4x256xf32>,
    return
  }
  func.func @transform_0(%arg0: i32, %arg1: i32) -> (i32, i32) {
    %c0_i32 = arith.constant 0 : i32
    %c0_i32_0 = arith.constant 0 : i32
    %c0_i32_1 = arith.constant 0 : i32
    return %c0_i32, %c0_i32_0 : i32, i32
  }
  func.func @transform_1(%arg0: i32, %arg1: i32) -> (i32, i32) {
    %c0_i32 = arith.constant 0 : i32
    %c0_i32_0 = arith.constant 0 : i32
    return %c0_i32, %arg1 : i32, i32
  }
  func.func @transform_2(%arg0: i32, %arg1: i32) -> (i32, i32, i32) {
    %c0_i32 = arith.constant 0 : i32
    %c0_i32_0 = arith.constant 0 : i32
    %c0_i32_1 = arith.constant 0 : i32
    return %arg0, %c0_i32, %c0_i32_0 : i32, i32, i32
  }
  func.func @transform_3(%arg0: i32, %arg1: i32) -> (i32, i32, i32) {
    %c0_i32 = arith.constant 0 : i32
    %c0_i32_0 = arith.constant 0 : i32
    return %arg0, %c0_i32, %arg1 : i32, i32, i32
  }
}

</mosaic_0001>

<llo_original>
// kernel: tpu_custom_call.1
$region0: #{tpu_custom_call.1}
  #allocation0 [shape = 'u32[]', space=smem, size = 0x4, offset = 0x4, fixed_abs, tag = 'smem constant byte address 0x4 - core index']
  #allocation1 [shape = 'u32[144,128]{1,0:T(1,128)}', space=vmem, size = 0x12000, scoped, tag = 'internal scratch']
  %s0 = inlined_call_operand.hbm [shape: f32[2,6], index: 0, kind: input, shape index: {}]
  %s1 = inlined_call_operand.hbm [shape: f32[2,256], index: 1, kind: input, shape index: {}]
  %s2 = inlined_call_operand.hbm [shape: f32[2,64,16], index: 2, kind: input, shape index: {}]
  %s3 = inlined_call_operand.hbm [shape: f32[2,4,256], index: 3, kind: output, shape index: {}]
  %s4 = sld [smem:[#allocation0]]
  $region57: #{tpu_custom_call.1} parent=0
    _
  %s6 = ssub.s32 1, %s4
  %s7 = scalar_select 0, %s6, %s4
  $region1: #{tpu_custom_call.1} parent=0
    #allocation2 [shape = 'u8[1024]{0}', space=smem, size = 0x400, scoped, tag = 'input window, operand 0, single buffered']
    #allocation3 [shape = 's32[2]{0}', space=sflag, size = 0x8, scoped, tag = 'scoped memory for tpu_custom_call.1']
    #allocation4 [shape = 's32[2]{0}', space=sflag, size = 0x8, scoped, tag = 'scoped memory for tpu_custom_call.1']
    #allocation5 [shape = 's32[2]{0}', space=sflag, size = 0x8, scoped, tag = 'scoped memory for tpu_custom_call.1']
    #allocation6 [shape = 'u8[2048]{0}', space=vmem, size = 0x800, scoped, tag = 'input window, operand 1, single buffered']
    #allocation7 [shape = 'u8[65536]{0}', space=vmem, size = 0x10000, scoped, tag = 'input window, operand 2']
    #allocation8 [shape = 's32[2]{0}', space=sflag, size = 0x8, scoped, tag = 'scoped memory for tpu_custom_call.1']
    #allocation9 [shape = 'u8[8192]{0}', space=vmem, size = 0x2000, scoped, tag = 'output window, operand 0']
    %8 = vsyncpa [#allocation5], 0
    %9 = vsyncpa [#allocation3], 0
    %10 = vsyncpa [#allocation8], 0
    %s11 = scalar_lea.sflag [#allocation8], 1
    %12 = vsyncpa %s11, 0
    %13 = vsyncpa [#allocation4], 0
    %s14 = scalar_lea.sflag [#allocation4], 1
    %15 = vsyncpa %s14, 0
    loop: start=0, step=1, limit=4
    $region2: #{tpu_custom_call.1} parent=1 // loop_pre_header
      _
    $region3: #{tpu_custom_call.1} parent=1 // loop_header
      %s17 = sphi 0, %s21
      %p18 = scmp.ge.s32.totalorder %s17, 4
      %s24 = sphi 0, %s36
      %s25 = sphi 0, %s32
      %s26 = sphi 0, %s24
      %s27 = sphi 0, %s25
      %s28 = sphi 0, %s26
      %s29 = sphi 0, %s27
      %s37 = sphi 0, %s37
      %s39 = sphi 0, %s37
      %s40 = sphi 0, %s39
      %s54 = sphi 0, %s40
      %s60 = sphi 0, %s62
      %s63 = sphi 0, %s60
      %s64 = sphi 0, %s63
      %s80 = sphi 0, %s64
      %s86 = sphi 0, %s88
      %s89 = sphi 0, %s86
      %s90 = sphi 0, %s89
      %s106 = sphi 0, %s90
      %s114 = sphi 0, %s116
      %s117 = sphi 0, %s114
      %s118 = sphi 0, %s117
      %s134 = sphi 0, %s118
    $region4: #{tpu_custom_call.1} parent=1 // loop_header_branch
      %20 = sbr.rel (%p18) target = $region8
    $region5: #{tpu_custom_call.1} parent=1 // loop_body
      %s22 = ssub.s32 %s17, 1
      %s23 = ssub.s32 %s17, 2
      %s30 = sadd.s32 1, %s25
      %p31 = scmp.ge.s32.totalorder %s30, 1
      %s32 = scalar_select %p31, 0, %s30
      %s33 = sadd.s32 1, %s24
      %s34 = scalar_select %p31, %s33, %s24
      %p35 = scmp.ge.s32.totalorder %s34, 2
      %s36 = scalar_select %p35, 0, %s34
      %s38 = sadd.s32 %s37, 1
      %p41 = scmp.eq.s32.totalorder %s17, 1
      %p42 = scmp.ne.s32.totalorder %s37, %s39
      %p43 = scmp.eq.s32.totalorder %s17, 0
      %p44 = por %p42, %p43
      %p45 = scmp.ne.s32.totalorder %s37, %s39
      %p46 = scmp.eq.s32.totalorder %s22, 1
      %p47 = por %p45, %p46
      %p48 = scmp.ne.s32.totalorder %s39, %s40
      %p49 = scmp.eq.s32.totalorder %s22, 0
      %p50 = por %p48, %p49
      %p51 = scmp.ne.s32.totalorder %s39, %s40
      %p52 = scmp.eq.s32.totalorder %s23, 1
      %p53 = por %p51, %p52
      %p55 = scmp.ne.s32.totalorder %s40, %s54
      %p56 = scmp.eq.s32.totalorder %s23, 0
      %p57 = por %p55, %p56
      %s58 = ssub.s32 %s25, %s32
      %p59 = scmp.eq.s32.totalorder %s58, 0
      %s61 = sadd.s32 %s60, 1
      %s62 = scalar_select %p59, %s60, %s61
      %p65 = pneg %p59
      %p66 = scmp.eq.s32.totalorder %s17, 1
      %p67 = por %p65, %p66
      %p68 = scmp.ne.s32.totalorder %s60, %s63
      %p69 = scmp.eq.s32.totalorder %s17, 0
      %p70 = por %p68, %p69
      %p71 = scmp.ne.s32.totalorder %s60, %s63
      %p72 = scmp.eq.s32.totalorder %s22, 1
      %p73 = por %p71, %p72
      %p74 = scmp.ne.s32.totalorder %s63, %s64
      %p75 = scmp.eq.s32.totalorder %s22, 0
      %p76 = por %p74, %p75
      %p77 = scmp.ne.s32.totalorder %s63, %s64
      %p78 = scmp.eq.s32.totalorder %s23, 1
      %p79 = por %p77, %p78
      %p81 = scmp.ne.s32.totalorder %s64, %s80
      %p82 = scmp.eq.s32.totalorder %s23, 0
      %p83 = por %p81, %p82
      %s84 = ssub.s32 %s24, %s36
      %p85 = scmp.eq.s32.totalorder %s84, 0
      %s87 = sadd.s32 %s86, 1
      %s88 = scalar_select %p85, %s86, %s87
      %p91 = pneg %p85
      %p92 = scmp.eq.s32.totalorder %s17, 1
      %p93 = por %p91, %p92
      %p94 = scmp.ne.s32.totalorder %s86, %s89
      %p95 = scmp.eq.s32.totalorder %s17, 0
      %p96 = por %p94, %p95
      %p97 = scmp.ne.s32.totalorder %s86, %s89
      %p98 = scmp.eq.s32.totalorder %s22, 1
      %p99 = por %p97, %p98
      %p100 = scmp.ne.s32.totalorder %s89, %s90
      %p101 = scmp.eq.s32.totalorder %s22, 0
      %p102 = por %p100, %p101
      %p103 = scmp.ne.s32.totalorder %s89, %s90
      %p104 = scmp.eq.s32.totalorder %s23, 1
      %p105 = por %p103, %p104
      %p107 = scmp.ne.s32.totalorder %s90, %s106
      %p108 = scmp.eq.s32.totalorder %s23, 0
      %p109 = por %p107, %p108
      %s110 = ssub.s32 %s24, %s36
      %s111 = ssub.s32 %s25, %s32
      %s112 = sor.u32 %s110, %s111
      %p113 = scmp.eq.s32.totalorder %s112, 0
      %s115 = sadd.s32 %s114, 1
      %s116 = scalar_select %p113, %s114, %s115
      %p119 = pneg %p113
      %p120 = scmp.eq.s32.totalorder %s17, 1
      %p121 = por %p119, %p120
      %p122 = scmp.ne.s32.totalorder %s114, %s117
      %p123 = scmp.eq.s32.totalorder %s17, 0
      %p124 = por %p122, %p123
      %p125 = scmp.ne.s32.totalorder %s114, %s117
      %p126 = scmp.eq.s32.totalorder %s22, 1
      %p127 = por %p125, %p126
      %p128 = scmp.ne.s32.totalorder %s117, %s118
      %p129 = scmp.eq.s32.totalorder %s22, 0
      %p130 = por %p128, %p129
      %p131 = scmp.ne.s32.totalorder %s117, %s118
      %p132 = scmp.eq.s32.totalorder %s23, 1
      %p133 = por %p131, %p132
      %p135 = scmp.ne.s32.totalorder %s118, %s134
      %p136 = scmp.eq.s32.totalorder %s23, 0
      %p137 = por %p135, %p136
      %p138 = scmp.le.s32.totalorder 1, %s17
      %p139 = scmp.lt.s32.totalorder %s17, 3
      %p140 = pnand %p138, %p139
      %p141 = pneg %p140
      // Predicated region
      $region9: #{tpu_custom_call.1} parent=5 // pred_check
        _
      $region10: #{tpu_custom_call.1} parent=5 // pred_check_branch
        %143 = sbr.rel (%p140) target = $region12
      $region11: #{tpu_custom_call.1} parent=5 // pred_region
        %s144 = ssub.s32 %s17, 1
        // Predicated region
        $region13: #{tpu_custom_call.1} parent=11 // pred_check
          %p145 = pneg %p50
        $region14: #{tpu_custom_call.1} parent=11 // pred_check_branch
          %147 = sbr.rel (%p145) target = $region16
        $region15: #{tpu_custom_call.1} parent=11 // pred_region
          %s149 = ssub.s32 32, 32
          %150 = vsyncadd [#allocation5], %s149
          %153 = dma.hbm_to_smem %s0, 32, [#allocation2], [#allocation5]
        $region16: #{tpu_custom_call.1} parent=11 // pred_fallthru
          _
        // Predicated region
        $region17: #{tpu_custom_call.1} parent=11 // pred_check
          %p154 = pneg %p76
        $region18: #{tpu_custom_call.1} parent=11 // pred_check_branch
          %156 = sbr.rel (%p154) target = $region20
        $region19: #{tpu_custom_call.1} parent=11 // pred_region
          %s157 = smul.u32 2, %s27
          %s159 = ssub.s32 64, 64
          %160 = vsyncadd [#allocation3], %s159
          %s161 = smul.addr %s157, 32
          %s162 = scalar_lea.hbm %s1, %s161
          %s164 = sshll.u32 [#allocation6], 4
          %s165 = int_to_ptr.vmem [resolvable:$true] %s164
          %167 = dma.hbm_to_vmem [thread:$0]  %s162, 64, %s165, [#allocation3]
        $region20: #{tpu_custom_call.1} parent=11 // pred_fallthru
          _
      $region12: #{tpu_custom_call.1} parent=5 // pred_fallthru
        _
      %p168 = scmp.lt.s32.totalorder %s17, 2
      // Predicated region
      $region21: #{tpu_custom_call.1} parent=5 // pred_check
        %p169 = pneg %p168
      $region22: #{tpu_custom_call.1} parent=5 // pred_check_branch
        %171 = sbr.rel (%p169) target = $region24
      $region23: #{tpu_custom_call.1} parent=5 // pred_region
        // Predicated region
        $region25: #{tpu_custom_call.1} parent=23 // pred_check
          %p172 = pneg %p96
        $region26: #{tpu_custom_call.1} parent=23 // pred_check_branch
          %174 = sbr.rel (%p172) target = $region28
        $region27: #{tpu_custom_call.1} parent=23 // pred_region
          %s175 = sand.u32 %s86, 1
          %s176 = scalar_lea.sflag [#allocation8], %s175
          %s177 = sand.u32 %s86, 1
          %s178 = smul.addr %s177, 64
          %s179 = scalar_lea.vmem [#allocation7], %s178
          %s181 = ssub.s32 1024, 1024
          %182 = vsyncadd %s176, %s181
          %s183 = smul.addr %s24, 8
          %s184 = smul.addr %s183, 128
          %s185 = scalar_lea.hbm %s2, %s184
          %s186 = sshll.u32 %s179, 4
          %s187 = int_to_ptr.vmem [resolvable:$true] %s186
          %192 = dma.hbm_to_vmem [thread:$0]  %s185, 1024, %s187, %s176, 128, 128, 8
        $region28: #{tpu_custom_call.1} parent=23 // pred_fallthru
          _
      $region24: #{tpu_custom_call.1} parent=5 // pred_fallthru
        _
      %p193 = scmp.le.s32.totalorder 1, %s17
      %p194 = scmp.lt.s32.totalorder %s17, 3
      %p195 = pnand %p193, %p194
      %p196 = pneg %p195
      // Predicated region
      $region29: #{tpu_custom_call.1} parent=5 // pred_check
        _
      $region30: #{tpu_custom_call.1} parent=5 // pred_check_branch
        %198 = sbr.rel (%p195) target = $region32
      $region31: #{tpu_custom_call.1} parent=5 // pred_region
        %s199 = ssub.s32 %s17, 1
        // Predicated region
        $region33: #{tpu_custom_call.1} parent=31 // pred_check
          %p200 = pneg %p50
        $region34: #{tpu_custom_call.1} parent=31 // pred_check_branch
          %202 = sbr.rel (%p200) target = $region36
        $region35: #{tpu_custom_call.1} parent=31 // pred_region
          %203 = dma.done [#allocation5], 32
        $region36: #{tpu_custom_call.1} parent=31 // pred_fallthru
          _
        // Predicated region
        $region37: #{tpu_custom_call.1} parent=31 // pred_check
          %p204 = pneg %p76
        $region38: #{tpu_custom_call.1} parent=31 // pred_check_branch
          %206 = sbr.rel (%p204) target = $region40
        $region39: #{tpu_custom_call.1} parent=31 // pred_region
          %207 = dma.done [#allocation3], 64
        $region40: #{tpu_custom_call.1} parent=31 // pred_fallthru
          _
        %s208 = sand.u32 %s89, 1
        %s209 = scalar_lea.sflag [#allocation8], %s208
        %s210 = sand.u32 %s89, 1
        %s211 = smul.addr %s210, 64
        %s212 = scalar_lea.vmem [#allocation7], %s211
        // Predicated region
        $region41: #{tpu_custom_call.1} parent=31 // pred_check
          %p213 = pneg %p102
        $region42: #{tpu_custom_call.1} parent=31 // pred_check_branch
          %215 = sbr.rel (%p213) target = $region44
        $region43: #{tpu_custom_call.1} parent=31 // pred_region
          %216 = dma.done %s209, 1024
        $region44: #{tpu_custom_call.1} parent=31 // pred_fallthru
          _
        %217 = sfence
        %p218 = pneg %p50
        %p219 = pneg %p47
        %p220 = pneg %p76
        %p221 = pneg %p73
        %s222 = sand.u32 %s89, 1
        %s223 = scalar_lea.sflag [#allocation8], %s222
        %s224 = sand.u32 %s89, 1
        %s225 = smul.addr %s224, 64
        %s226 = scalar_lea.vmem [#allocation7], %s225
        %p227 = pneg %p102
        %p228 = pneg %p99
        %p229 = pneg %p130
        %p230 = pneg %p127
        %s231 = sand.u32 %s117, 1
        %s232 = scalar_lea.sflag [#allocation4], %s231
        %s233 = sand.u32 %s117, 1
        %s234 = smul.addr %s233, 8
        %s235 = scalar_lea.vmem [#allocation9], %s234
        %s236 = smul.u32 2, %s27
        %s237 = smul.u32 2, %s27
        %s238 = smul.u32 %s26, 128
        %s239 = sld [smem:[#allocation2 + %s238]]
        %s240 = sadd.s32 %s238, 1
        %s241 = sld [smem:[#allocation2 + %s240]]
        %s242 = sadd.s32 %s238, 2
        %s243 = sld [smem:[#allocation2 + %s242]]
        %s244 = sadd.s32 %s238, 3
        %s245 = sld [smem:[#allocation2 + %s244]]
        %s246 = sadd.s32 %s238, 4
        %s247 = sld [smem:[#allocation2 + %s246]]
        %s248 = sadd.s32 %s238, 5
        %s249 = sld [smem:[#allocation2 + %s248]]
        %v250 = vld [vmem:[#allocation6] ss:$2 sm:$0x3]
        %s251 = scalar_lea.vmem [#allocation6], 1
        %v252 = vld [vmem:[%s251] ss:$2 sm:$0x3]
        %v253 = vstv %s239
        %v254 = vmul.f32 %v253, %v250
        %v255 = vstv %s241
        %v256 = vmul.f32 %v255, %v252
        %v257 = vadd.f32 %v254, %v256
        %v258 = vstv %s243
        %v259 = vadd.f32 %v257, %v258
        %v260 = vstv %s245
        %v261 = vmul.f32 %v260, %v250
        %v262 = vstv %s247
        %v263 = vmul.f32 %v262, %v252
        %v264 = vadd.f32 %v261, %v263
        %v265 = vstv %s249
        %v266 = vadd.f32 %v264, %v265
        %v267 = vfloor.f32 %v259
        %v268 = vfloor.f32 %v266
        %v269 = vsub.f32 %v259, %v267
        %v270 = vsub.f32 %v266, %v268
        %vm271 = vcmp.ne.f32.partialorder %v267, %v267
        %v272 = vsel %vm271, 18.0, %v267
        %vm273 = vcmp.ne.f32.partialorder %v268, %v268
        %v274 = vsel %vm273, 18.0, %v268
        %v275 = vmax.f32 %v272, -2.0
        %v276 = vmin.f32 %v275, 16.0
        %v277 = vcvt.f32.s32.to.zero.pseudo %v276
        %v278 = vmax.f32 %v274, -2.0
        %v279 = vmin.f32 %v278, 16.0
        %v280 = vcvt.f32.s32.to.zero.pseudo %v279
        %v281 = vlaneseq
        %v282 = vshrl.u32 %v281, 7
        %v283 = vadd.s32 %v282, 8
        %v284 = vlaneseq
        %v285 = vshrl.u32 %v284, 7
        %v286 = vsub.s32 0, %v285
        %v287 = vrot.slane %v277, %v286
        %v288 = vlaneseq
        %v289 = vshrl.u32 %v288, 7
        %v290 = vsub.s32 1, %v289
        %v291 = vrot.slane %v277, %v290
        %vm292 = vcmp.eq.s32.totalorder %v282, %v287
        %vm293 = vcmp.eq.s32.totalorder %v282, %v291
        %vm294 = vcmp.eq.s32.totalorder %v283, %v287
        %vm295 = vcmp.eq.s32.totalorder %v283, %v291
        %v296 = vsub.f32 1.0, %v269
        %v298 = vlaneseq
        %v299 = vshrl.u32 %v298, 7
        %v300 = vsub.s32 0, %v299
        %v301 = vrot.slane %v296, %v300
        %v302 = vlaneseq
        %v303 = vshrl.u32 %v302, 7
        %v304 = vsub.s32 1, %v303
        %v305 = vrot.slane %v296, %v304
        %v308 = vsel %vm292, %v301, 0.0
        %v309 = vsel %vm293, %v305, 0.0
        %v310 = vsel %vm294, %v301, 0.0
        %v311 = vsel %vm295, %v305, 0.0
        %v312 = vadd.s32 %v277, 1
        %v313 = vlaneseq
        %v314 = vshrl.u32 %v313, 7
        %v315 = vsub.s32 0, %v314
        %v316 = vrot.slane %v312, %v315
        %v317 = vlaneseq
        %v318 = vshrl.u32 %v317, 7
        %v319 = vsub.s32 1, %v318
        %v320 = vrot.slane %v312, %v319
        %vm321 = vcmp.eq.s32.totalorder %v282, %v316
        %vm322 = vcmp.eq.s32.totalorder %v282, %v320
        %vm323 = vcmp.eq.s32.totalorder %v283, %v316
        %vm324 = vcmp.eq.s32.totalorder %v283, %v320
        %v326 = vlaneseq
        %v327 = vshrl.u32 %v326, 7
        %v328 = vsub.s32 0, %v327
        %v329 = vrot.slane %v269, %v328
        %v330 = vlaneseq
        %v331 = vshrl.u32 %v330, 7
        %v332 = vsub.s32 1, %v331
        %v333 = vrot.slane %v269, %v332
        %v336 = vsel %vm321, %v329, 0.0
        %v337 = vsel %vm322, %v333, 0.0
        %v338 = vsel %vm323, %v329, 0.0
        %v339 = vsel %vm324, %v333, 0.0
        %v340 = vadd.f32 %v308, %v336
        %v341 = vadd.f32 %v309, %v337
        %v342 = vadd.f32 %v310, %v338
        %v343 = vadd.f32 %v311, %v339
        %v344 = vlaneseq
        %v345 = vshrl.u32 %v344, 7
        %v346 = vsub.s32 0, %v345
        %v347 = vrot.slane %v280, %v346
        %v348 = vlaneseq
        %v349 = vshrl.u32 %v348, 7
        %v350 = vsub.s32 1, %v349
        %v351 = vrot.slane %v280, %v350
        %vm352 = vcmp.eq.s32.totalorder %v282, %v347
        %vm353 = vcmp.eq.s32.totalorder %v282, %v351
        %vm354 = vcmp.eq.s32.totalorder %v283, %v347
        %vm355 = vcmp.eq.s32.totalorder %v283, %v351
        %v356 = vsub.f32 1.0, %v270
        %v358 = vlaneseq
        %v359 = vshrl.u32 %v358, 7
        %v360 = vsub.s32 0, %v359
        %v361 = vrot.slane %v356, %v360
        %v362 = vlaneseq
        %v363 = vshrl.u32 %v362, 7
        %v364 = vsub.s32 1, %v363
        %v365 = vrot.slane %v356, %v364
        %v368 = vsel %vm352, %v361, 0.0
        %v369 = vsel %vm353, %v365, 0.0
        %v370 = vsel %vm354, %v361, 0.0
        %v371 = vsel %vm355, %v365, 0.0
        %v372 = vadd.s32 %v280, 1
        %v373 = vlaneseq
        %v374 = vshrl.u32 %v373, 7
        %v375 = vsub.s32 0, %v374
        %v376 = vrot.slane %v372, %v375
        %v377 = vlaneseq
        %v378 = vshrl.u32 %v377, 7
        %v379 = vsub.s32 1, %v378
        %v380 = vrot.slane %v372, %v379
        %vm381 = vcmp.eq.s32.totalorder %v282, %v376
        %vm382 = vcmp.eq.s32.totalorder %v282, %v380
        %vm383 = vcmp.eq.s32.totalorder %v283, %v376
        %vm384 = vcmp.eq.s32.totalorder %v283, %v380
        %v386 = vlaneseq
        %v387 = vshrl.u32 %v386, 7
        %v388 = vsub.s32 0, %v387
        %v389 = vrot.slane %v270, %v388
        %v390 = vlaneseq
        %v391 = vshrl.u32 %v390, 7
        %v392 = vsub.s32 1, %v391
        %v393 = vrot.slane %v270, %v392
        %v396 = vsel %vm381, %v389, 0.0
        %v397 = vsel %vm382, %v393, 0.0
        %v398 = vsel %vm383, %v389, 0.0
        %v399 = vsel %vm384, %v393, 0.0
        %v400 = vadd.f32 %v368, %v396
        %v401 = vadd.f32 %v369, %v397
        %v402 = vadd.f32 %v370, %v398
        %v403 = vadd.f32 %v371, %v399
        %v404 = vld [vmem:[%s212] sm:$0xff]
        %v405 = vld [vmem:[%s212 + $0x8] sm:$0xff]
        %v406 = vld [vmem:[%s212 + $0x10] sm:$0xff]
        %v407 = vld [vmem:[%s212 + $0x18] sm:$0xff]
        %v408 = vld [vmem:[%s212 + $0x20] sm:$0xff]
        %v409 = vld [vmem:[%s212 + $0x28] sm:$0xff]
        %v410 = vld [vmem:[%s212 + $0x30] sm:$0xff]
        %v411 = vld [vmem:[%s212 + $0x38] sm:$0xff]
        %vm412 = vcmask 130048
        %v414 = vsel %vm412, %v404, 0
        %v417 = vsel %vm412, %v405, 0
        %v420 = vsel %vm412, %v406, 0
        %v423 = vsel %vm412, %v407, 0
        %v426 = vsel %vm412, %v408, 0
        %v429 = vsel %vm412, %v409, 0
        %v432 = vsel %vm412, %v410, 0
        %v435 = vsel %vm412, %v411, 0
        %437 = vmatprep.subr.mxu0 %v341
        %438 = vmatpush1.msra.mxu0 %v340
        %439 = vmatprep.subr.mxu0 %v343
        %440 = vmatpush1.msra.mxu0 %v342
        %441 = vmatprep.subr.mxu0 0.0
        %442 = vmatpush1.msra.mxu0 0.0
        %443 = vmatprep.subr.mxu0 0.0
        %444 = vmatpush1.msra.mxu0 0.0
        %445 = vmatprep.subr.mxu0 0.0
        %446 = vmatpush1.msra.mxu0 0.0
        %447 = vmatprep.subr.mxu0 0.0
        %448 = vmatpush1.msra.mxu0 0.0
        %449 = vmatprep.subr.mxu0 0.0
        %450 = vmatpush1.msra.mxu0 0.0
        %451 = vmatprep.subr.mxu0 0.0
        %452 = vmatpush1.msra.mxu0 0.0
        %453 = vmatprep.subr.mxu0 0.0
        %454 = vmatpush1.msra.mxu0 0.0
        %455 = vmatprep.subr.mxu0 0.0
        %456 = vmatpush1.msra.mxu0 0.0
        %457 = vmatprep.subr.mxu0 0.0
        %458 = vmatpush1.msra.mxu0 0.0
        %459 = vmatprep.subr.mxu0 0.0
        %460 = vmatpush1.msra.mxu0 0.0
        %461 = vmatprep.subr.mxu0 0.0
        %462 = vmatpush1.msra.mxu0 0.0
        %463 = vmatprep.subr.mxu0 0.0
        %464 = vmatpush1.msra.mxu0 0.0
        %465 = vmatprep.subr.mxu0 0.0
        %466 = vmatpush1.msra.mxu0 0.0
        %467 = vmatprep.subr.mxu0 0.0
        %468 = vmatpush1.msra.mxu0 0.0
        %469 = vmatprep.subr.mxu0 0.0
        %470 = vmatpush1.msra.mxu0 0.0
        %471 = vmatprep.subr.mxu0 0.0
        %472 = vmatpush1.msra.mxu0 0.0
        %473 = vmatprep.subr.mxu0 0.0
        %474 = vmatpush1.msra.mxu0 0.0
        %475 = vmatprep.subr.mxu0 0.0
        %476 = vmatpush1.msra.mxu0 0.0
        %477 = vmatprep.subr.mxu0 0.0
        %478 = vmatpush1.msra.mxu0 0.0
        %479 = vmatprep.subr.mxu0 0.0
        %480 = vmatpush1.msra.mxu0 0.0
        %481 = vmatprep.subr.mxu0 0.0
        %482 = vmatpush1.msra.mxu0 0.0
        %483 = vmatprep.subr.mxu0 0.0
        %484 = vmatpush1.msra.mxu0 0.0
        %485 = vmatprep.subr.mxu0 0.0
        %486 = vmatpush1.msra.mxu0 0.0
        %487 = vmatprep.subr.mxu0 0.0
        %488 = vmatpush1.msra.mxu0 0.0
        %489 = vmatprep.subr.mxu0 0.0
        %490 = vmatpush1.msra.mxu0 0.0
        %491 = vmatprep.subr.mxu0 0.0
        %492 = vmatpush1.msra.mxu0 0.0
        %493 = vmatprep.subr.mxu0 0.0
        %494 = vmatpush1.msra.mxu0 0.0
        %495 = vmatprep.subr.mxu0 0.0
        %496 = vmatpush1.msra.mxu0 0.0
        %497 = vmatprep.subr.mxu0 0.0
        %498 = vmatpush1.msra.mxu0 0.0
        %499 = vmatprep.subr.mxu0 0.0
        %500 = vmatpush1.msra.mxu0 0.0
        %501 = vmatprep.mubr.f32.mxu0 0.0
        %502 = vmatmul.mubr.f32.gmra.mrb[0].mxu0 %v414
        %v503 = vpop.f32.mrb[0].mxu0
        %v504 = vadd.f32 0.0, %v503
        %v505 = vpop.f32.mrb[0].mxu0
        %v506 = vadd.f32 0.0, %v505
        %507 = vmatprep.mubr.f32.mxu0 0.0
        %508 = vmatmul.mubr.f32.gmra.mrb[0].mxu0 %v417
        %v509 = vpop.f32.mrb[0].mxu0
        %v510 = vadd.f32 0.0, %v509
        %v511 = vpop.f32.mrb[0].mxu0
        %v512 = vadd.f32 0.0, %v511
        %513 = vmatprep.mubr.f32.mxu0 0.0
        %514 = vmatmul.mubr.f32.gmra.mrb[0].mxu0 %v420
        %v515 = vpop.f32.mrb[0].mxu0
        %v516 = vadd.f32 0.0, %v515
        %v517 = vpop.f32.mrb[0].mxu0
        %v518 = vadd.f32 0.0, %v517
        %519 = vmatprep.mubr.f32.mxu0 0.0
        %520 = vmatmul.mubr.f32.gmra.mrb[0].mxu0 %v423
        %v521 = vpop.f32.mrb[0].mxu0
        %v522 = vadd.f32 0.0, %v521
        %v523 = vpop.f32.mrb[0].mxu0
        %v524 = vadd.f32 0.0, %v523
        %525 = vmatprep.mubr.f32.mxu0 0.0
        %526 = vmatmul.mubr.f32.gmra.mrb[0].mxu0 %v426
        %v527 = vpop.f32.mrb[0].mxu0
        %v528 = vadd.f32 0.0, %v527
        %v529 = vpop.f32.mrb[0].mxu0
        %v530 = vadd.f32 0.0, %v529
        %531 = vmatprep.mubr.f32.mxu0 0.0
        %532 = vmatmul.mubr.f32.gmra.mrb[0].mxu0 %v429
        %v533 = vpop.f32.mrb[0].mxu0
        %v534 = vadd.f32 0.0, %v533
        %v535 = vpop.f32.mrb[0].mxu0
        %v536 = vadd.f32 0.0, %v535
        %537 = vmatprep.mubr.f32.mxu0 0.0
        %538 = vmatmul.mubr.f32.gmra.mrb[0].mxu0 %v432
        %v539 = vpop.f32.mrb[0].mxu0
        %v540 = vadd.f32 0.0, %v539
        %v541 = vpop.f32.mrb[0].mxu0
        %v542 = vadd.f32 0.0, %v541
        %543 = vmatprep.mubr.f32.mxu0 0.0
        %544 = vmatmul.mubr.f32.gmra.mrb[0].mxu0 %v435
        %v545 = vpop.f32.mrb[0].mxu0
        %v546 = vadd.f32 0.0, %v545
        %v547 = vpop.f32.mrb[0].mxu0
        %v548 = vadd.f32 0.0, %v547
        %549 = vdwg.mxu0
        %v550 = vmul.f32 %v504, %v400
        %v551 = vmul.f32 %v506, %v401
        %v552 = vmul.f32 %v510, %v402
        %v553 = vmul.f32 %v512, %v403
        %v554 = vmul.f32 %v516, %v400
        %v555 = vmul.f32 %v518, %v401
        %v556 = vmul.f32 %v522, %v402
        %v557 = vmul.f32 %v524, %v403
        %v558 = vmul.f32 %v528, %v400
        %v559 = vmul.f32 %v530, %v401
        %v560 = vmul.f32 %v534, %v402
        %v561 = vmul.f32 %v536, %v403
        %v562 = vmul.f32 %v540, %v400
        %v563 = vmul.f32 %v542, %v401
        %v564 = vmul.f32 %v546, %v402
        %v565 = vmul.f32 %v548, %v403
        %v566 = vadd.f32 %v550, %v552
        %v567 = vrot.slane %v566, 4
        %v568 = vadd.f32 %v566, %v567
        %v569 = vrot.slane %v568, 2
        %v570 = vadd.f32 %v568, %v569
        %v571 = vrot.slane %v570, 1
        %v572 = vadd.f32 %v570, %v571
        %v573 = vadd.f32 %v551, %v553
        %v574 = vrot.slane %v573, 4
        %v575 = vadd.f32 %v573, %v574
        %v576 = vrot.slane %v575, 2
        %v577 = vadd.f32 %v575, %v576
        %v578 = vrot.slane %v577, 1
        %v579 = vadd.f32 %v577, %v578
        %v580 = vadd.f32 %v554, %v556
        %v581 = vrot.slane %v580, 4
        %v582 = vadd.f32 %v580, %v581
        %v583 = vrot.slane %v582, 2
        %v584 = vadd.f32 %v582, %v583
        %v585 = vrot.slane %v584, 1
        %v586 = vadd.f32 %v584, %v585
        %v587 = vadd.f32 %v555, %v557
        %v588 = vrot.slane %v587, 4
        %v589 = vadd.f32 %v587, %v588
        %v590 = vrot.slane %v589, 2
        %v591 = vadd.f32 %v589, %v590
        %v592 = vrot.slane %v591, 1
        %v593 = vadd.f32 %v591, %v592
        %v594 = vadd.f32 %v558, %v560
        %v595 = vrot.slane %v594, 4
        %v596 = vadd.f32 %v594, %v595
        %v597 = vrot.slane %v596, 2
        %v598 = vadd.f32 %v596, %v597
        %v599 = vrot.slane %v598, 1
        %v600 = vadd.f32 %v598, %v599
        %v601 = vadd.f32 %v559, %v561
        %v602 = vrot.slane %v601, 4
        %v603 = vadd.f32 %v601, %v602
        %v604 = vrot.slane %v603, 2
        %v605 = vadd.f32 %v603, %v604
        %v606 = vrot.slane %v605, 1
        %v607 = vadd.f32 %v605, %v606
        %v608 = vadd.f32 %v562, %v564
        %v609 = vrot.slane %v608, 4
        %v610 = vadd.f32 %v608, %v609
        %v611 = vrot.slane %v610, 2
        %v612 = vadd.f32 %v610, %v611
        %v613 = vrot.slane %v612, 1
        %v614 = vadd.f32 %v612, %v613
        %v615 = vadd.f32 %v563, %v565
        %v616 = vrot.slane %v615, 4
        %v617 = vadd.f32 %v615, %v616
        %v618 = vrot.slane %v617, 2
        %v619 = vadd.f32 %v617, %v618
        %v620 = vrot.slane %v619, 1
        %v621 = vadd.f32 %v619, %v620
        %v630 = vcombine.low %v572, %v579
        %v631 = vcombine.low %v586, %v593
        %v632 = vcombine.low %v600, %v607
        %v633 = vcombine.low %v614, %v621
        %v634 = vrot.slane %v631, 7
        %vm635 = vcmask 1041409
        %v636 = vsel %vm635, %v634, %v630
        %vm637 = vcmask 1045509
        %v638 = vsel %vm637, %v634, %v636
        %v639 = vrot.slane %v632, 6
        %vm640 = vcmask 1042434
        %v641 = vsel %vm640, %v639, %v638
        %vm642 = vcmask 1046534
        %v643 = vsel %vm642, %v639, %v641
        %v644 = vrot.slane %v633, 5
        %vm645 = vcmask 1043459
        %v646 = vsel %vm645, %v644, %v643
        %vm647 = vcmask 1047559
        %v648 = vsel %vm647, %v644, %v646
        %650 = vst [vmem:[%s235] sm:$0xff] %v648
        %s651 = sand.u32 %s117, 1
        %s652 = scalar_lea.sflag [#allocation4], %s651
        %s653 = sand.u32 %s117, 1
        %s654 = smul.addr %s653, 8
        %s655 = scalar_lea.vmem [#allocation9], %s654
        // Predicated region
        $region45: #{tpu_custom_call.1} parent=31 // pred_check
          %p656 = pneg %p127
        $region46: #{tpu_custom_call.1} parent=31 // pred_check_branch
          %658 = sbr.rel (%p656) target = $region48
        $region47: #{tpu_custom_call.1} parent=31 // pred_region
          %s659 = smul.u32 2, %s27
          %s661 = ssub.s32 128, 128
          %662 = vsyncadd %s652, %s661
          %s663 = smul.addr %s26, 2
          %s664 = sadd.s32 %s659, %s663
          %s665 = smul.addr %s664, 64
          %s666 = scalar_lea.hbm %s3, %s665
          %s668 = sshll.u32 %s655, 4
          %s669 = int_to_ptr.vmem [resolvable:$true] %s668
          %671 = dma.vmem_to_hbm [thread:$0]  %s669, 128, %s666, %s652
        $region48: #{tpu_custom_call.1} parent=31 // pred_fallthru
          _
      $region32: #{tpu_custom_call.1} parent=5 // pred_fallthru
        _
      %p672 = scmp.le.s32.totalorder 2, %s17
      // Predicated region
      $region49: #{tpu_custom_call.1} parent=5 // pred_check
        %p673 = pneg %p672
      $region50: #{tpu_custom_call.1} parent=5 // pred_check_branch
        %675 = sbr.rel (%p673) target = $region52
      $region51: #{tpu_custom_call.1} parent=5 // pred_region
        %s676 = ssub.s32 %s17, 2
        // Predicated region
        $region53: #{tpu_custom_call.1} parent=51 // pred_check
          %p677 = pneg %p133
        $region54: #{tpu_custom_call.1} parent=51 // pred_check_branch
          %679 = sbr.rel (%p677) target = $region56
        $region55: #{tpu_custom_call.1} parent=51 // pred_region
          %s680 = sand.u32 %s118, 1
          %s681 = scalar_lea.sflag [#allocation4], %s680
          %s682 = sand.u32 %s118, 1
          %s683 = smul.addr %s682, 8
          %s684 = scalar_lea.vmem [#allocation9], %s683
          %685 = dma.done %s681, 128
        $region56: #{tpu_custom_call.1} parent=51 // pred_fallthru
          _
      $region52: #{tpu_custom_call.1} parent=5 // pred_fallthru
        _
    $region6: #{tpu_custom_call.1} parent=1 // loop_footer
      %s21 = sadd.s32 1, %s17
    $region7: #{tpu_custom_call.1} parent=1 // loop_footer_branch
      %16 = sbr.rel target = $region3
    $region8: #{tpu_custom_call.1} parent=1 // loop_exit
      _
    %686 = vsyncpa [#allocation3], 1
    %s687 = scalar_lea.sflag [#allocation3], 1
    %688 = vsyncpa %s687, 1
    %689 = vsyncpa [#allocation8], 1
    %s690 = scalar_lea.sflag [#allocation8], 1
    %691 = vsyncpa %s690, 1
    %692 = vsyncpa [#allocation4], 1
    %s693 = scalar_lea.sflag [#allocation4], 1
    %694 = vsyncpa %s693, 1
    %695 = vsyncpa [#allocation5], 1
    %s696 = scalar_lea.sflag [#allocation5], 1
    %697 = vsyncpa %s696, 1

</llo_original>
